<compile_context>
chip_gen: v7x
topology: tpu7x:2x2x1
jax: 0.10.0
libtpu: 0.0.40
codegen_flags: <defaults>
</compile_context>

<pallas_src>
import functools

import jax
import jax.numpy as jnp
from jax.experimental import pallas as pl
from jax.experimental.pallas import tpu as pltpu

EPS = 1e-5
LANE = 128


def _round_up(x, m):
    return ((x + m - 1) // m) * m


def _vmem_budget_bytes():
    """~75% of physical VMEM (64 MiB on v7x, 128 MiB on v5e/v6e); safe fallback."""
    cap = 64 * 1024 * 1024
    try:
        cap = int(getattr(pltpu.get_tpu_info(), "vmem_capacity_bytes", cap))
    except Exception:
        pass
    return (min(cap, 128 * 1024 * 1024) * 3) // 4


def _pick_tile_m(M, max_rows):
    """Largest divisor of M (multiple of 8) <= max_rows, preferring >= 2 grid steps."""
    max_rows = max(8, min(int(max_rows), M))
    start = max_rows - (max_rows % 8)
    best = None
    for t in range(start, 7, -8):
        if M % t == 0:
            if M // t >= 2:
                return t
            if best is None:
                best = t
    if best is not None:
        return best
    for t in range(max_rows, 0, -1):           # fallback: any divisor (full-dim blocks ok)
        if M % t == 0 and (t % 8 == 0 or t == M):
            return t
    return M


def _pick_tile_h(H, W):
    """Image rows per Pass-B step: make TILE_H*W a decent matmul M dim (<=512, >=128)."""
    cands = [t for t in range(1, H + 1)
             if H % t == 0 and (t * W) % 8 == 0 and t * W <= 512]
    if not cands:
        cands = [t for t in range(1, H + 1) if H % t == 0 and (t * W) % 8 == 0]
    if not cands:
        return H
    best = max(cands)
    multi = [t for t in cands if H // t >= 2 and t * W >= 128]
    if H // best < 2 and multi:
        best = max(multi)
    return best


@functools.lru_cache(maxsize=None)
def _roll_is_jnp_convention():
    """True iff pltpu.roll(x, 1, axis=0)[i] == x[i-1] (i.e. matches jnp.roll). Probed once."""
    def k(x_ref, o_ref):
        o_ref[...] = pltpu.roll(x_ref[...], 1, 0)

    x = jnp.arange(8 * 128, dtype=jnp.float32).reshape(8, 128)
    try:
        y = pl.pallas_call(k, out_shape=jax.ShapeDtypeStruct((8, 128), jnp.float32))(x)
        return bool(y[1, 0] == x[0, 0])
    except Exception:
        return True


def _stat_tile(z):
    """(rows, Cp) f32 -> (8, Cp) [sum, sum_sq, 0...]; 8 sublanes => unmasked stores."""
    s = jnp.sum(z, axis=0, keepdims=True)
    ss = jnp.sum(z * z, axis=0, keepdims=True)
    return jnp.concatenate([s, ss, jnp.zeros((6, z.shape[-1]), jnp.float32)], axis=0)


# ---------------- Pass A: conv1x1 (+bias) + per-tile BN partial stats ----------------
def conv1x1_stats_kernel(x_ref, w_ref, b_ref, z_ref, st_ref):
    z = jnp.dot(x_ref[...], w_ref[...], preferred_element_type=jnp.float32) + b_ref[...]
    z_ref[...] = z.astype(z_ref.dtype)
    st_ref[0] = _stat_tile(z)


# -- Pass B: BN1 + ReLU + 3x3 conv (+bias) over TILE_H image rows + partial BN2 stats --
def bn_relu_conv3x3_kernel(main_ref, up_ref, dn_ref, sc_ref, sh_ref, w2_ref, b2_ref,
                           z2_ref, st_ref, *, W, TILE_H, HB, sh_down, sh_up):
    f32 = jnp.float32
    Cp = sc_ref.shape[-1]
    MT = TILE_H * W
    hb = pl.program_id(0) % HB

    scale = sc_ref[...]
    shift = sh_ref[...]

    # BN1 + ReLU in f32 (storage may be bf16) on the main block and the two halo rows.
    a_mid = jnp.maximum(main_ref[...].astype(f32) * scale + shift, 0.0)            # (MT, Cp)
    top_gate = (hb > 0).astype(f32)          # image-top zero padding
    bot_gate = (hb < HB - 1).astype(f32)     # image-bottom zero padding
    a_up = jnp.maximum(up_ref[0, 0].astype(f32) * scale + shift, 0.0) * top_gate   # (W, Cp)
    a_dn = jnp.maximum(dn_ref[0, 0].astype(f32) * scale + shift, 0.0) * bot_gate

    # Vertical taps kh = 0,1,2 (rows h-1, h, h+1): sublane-aligned concats (W % 8 == 0).
    A0 = jnp.concatenate([a_up, a_mid[:MT - W]], axis=0)
    A1 = a_mid
    A2 = jnp.concatenate([a_mid[W:], a_dn], axis=0)

    wdt = w2_ref.dtype
    taps = tuple(A.astype(wdt) for A in (A0, A1, A2))

    # 9 MXU matmuls (accumulated per kw); all accumulation in f32.
    acc = []
    for dx in range(3):
        c = jnp.zeros((MT, Cp), f32)
        for dy in range(3):
            c = c + jnp.dot(taps[dy], w2_ref[dy, dx], preferred_element_type=f32)
        acc.append(c)

    # Horizontal taps: roll the kw=0 / kw=2 contributions along W (XLU) + edge masks.
    w_pos = jax.lax.broadcasted_iota(jnp.int32, (MT, 1), 0) % W
    z2 = acc[1] + b2_ref[...]
    z2 = z2 + jnp.where(w_pos > 0, pltpu.roll(acc[0], sh_down, 0), 0.0)     # kw=0: col w-1
    z2 = z2 + jnp.where(w_pos < W - 1, pltpu.roll(acc[2], sh_up, 0), 0.0)   # kw=2: col w+1

    z2_ref[...] = z2.astype(z2_ref.dtype)
    st_ref[0] = _stat_tile(z2)


# ---------------- Pass C: BN2 + ReLU + conv1x1 (+bias) + partial BN3 stats ----------------
def bn_relu_conv1x1_stats_kernel(z2_ref, sc_ref, sh_ref, w_ref, b_ref, z3_ref, st_ref):
    f32 = jnp.float32
    a = jnp.maximum(z2_ref[...].astype(f32) * sc_ref[...] + sh_ref[...], 0.0)
    z = jnp.dot(a.astype(w_ref.dtype), w_ref[...], preferred_element_type=f32) + b_ref[...]
    z3_ref[...] = z.astype(z3_ref.dtype)
    st_ref[0] = _stat_tile(z)


# ----- Pass D: BN3 + identity shortcut applied to the left output (=> 2*y) + ReLU -----
def bn_residual_relu_kernel(z3_ref, sc_ref, sh_ref, out_ref):
    y = z3_ref[...].astype(jnp.float32) * sc_ref[...] + sh_ref[...]
    out_ref[...] = jnp.maximum(y + y, 0.0).astype(out_ref.dtype)


def _scale_shift(stat8, gamma_p, beta_p, count):
    """stat8: (8, Cp) [sum, sum_sq, ...] -> training-mode BN folded into scale/shift (f32)."""
    mean = stat8[0] / count
    var = jnp.maximum(stat8[1] / count - mean * mean, 0.0)
    inv = jax.lax.rsqrt(var + EPS)
    scale = gamma_p * inv
    shift = beta_p - mean * scale
    return scale.reshape(1, -1), shift.reshape(1, -1)


def resnet_block_forward(x_nchw, params, *, storage_dtype=jnp.float32):
    """x_nchw: (N, C, H, W) float32.  Returns (N, C, H, W) float32."""
    (w1, b1, g1, be1, w2, b2, g2, be2, w3, b3, g3, be3) = params
    N, C, H, W = x_nchw.shape
    Cp = _round_up(C, LANE)
    M = N * H * W
    f32 = jnp.float32
    sdt = storage_dtype

    vmem_budget = _vmem_budget_bytes()
    bytes_per_row = Cp * jnp.dtype(sdt).itemsize
    TILE_M = _pick_tile_m(M, max(8, min(1024, vmem_budget // (16 * bytes_per_row))))
    n_tiles = M // TILE_M
    TILE_H = _pick_tile_h(H, W)
    HB = H // TILE_H
    MT = TILE_H * W

    roll_fwd = _roll_is_jnp_convention()
    sh_down = 1 if roll_fwd else MT - 1        # amount realizing out[i] <- in[i-1]
    sh_up = MT - 1 if roll_fwd else 1          # amount realizing out[i] <- in[i+1]

    # ---- layout / padding glue (pure data movement; for real ResNet Cp == C) ----
    x_nhwc = jnp.transpose(x_nchw, (0, 2, 3, 1)).astype(f32)
    x_flat = x_nhwc.reshape(M, C)
    if Cp != C:
        x_flat = jnp.pad(x_flat, ((0, 0), (0, Cp - C)))
    x_flat = x_flat.astype(sdt)

    def pad_mat(w):                            # (Co,Ci,1,1) -> (Cp_in, Cp_out)
        wm = jnp.transpose(w[:, :, 0, 0]).astype(f32)
        return jnp.pad(wm, ((0, Cp - wm.shape[0]), (0, Cp - wm.shape[1]))).astype(sdt)

    def pad_row(v):
        return jnp.pad(v.astype(f32), (0, Cp - v.shape[0])).reshape(1, Cp)

    w1m = pad_mat(w1)
    w3m = pad_mat(w3)
    w2p = jnp.pad(w2.astype(f32), ((0, Cp - C), (0, Cp - C), (0, 0), (0, 0)))
    w2m = jnp.transpose(w2p, (2, 3, 1, 0)).astype(sdt)      # (kh, kw, Ci, Co)

    b1r, b2r, b3r = pad_row(b1), pad_row(b2), pad_row(b3)
    g1r, g2r, g3r = pad_row(g1), pad_row(g2), pad_row(g3)
    be1r, be2r, be3r = pad_row(be1), pad_row(be2), pad_row(be3)

    # ---- common specs (params use constant index maps -> VMEM-resident across the grid) ----
    row_spec = pl.BlockSpec((1, Cp), lambda i: (0, 0))
    mat_spec = pl.BlockSpec((Cp, Cp), lambda i: (0, 0))
    mtile_spec = pl.BlockSpec((TILE_M, Cp), lambda i: (i, 0))
    st_spec = pl.BlockSpec((1, 8, Cp), lambda i: (i, 0, 0))
    cparams = pltpu.CompilerParams(dimension_semantics=("parallel",),
                                   vmem_limit_bytes=vmem_budget)

    # ---- Pass A: z1 = x @ W1 + b1 ; partial BN1 stats ----
    z1_flat, st1 = pl.pallas_call(
        conv1x1_stats_kernel,
        grid=(n_tiles,),
        in_specs=[mtile_spec, mat_spec, row_spec],
        out_specs=(mtile_spec, st_spec),
        out_shape=(jax.ShapeDtypeStruct((M, Cp), sdt),
                   jax.ShapeDtypeStruct((n_tiles, 8, Cp), f32)),
        compiler_params=cparams,
    )(x_flat, w1m, b1r)
    sc1, sh1 = _scale_shift(jnp.sum(st1, axis=0), g1r[0], be1r[0], M)

    # ---- Pass B: a1 = relu(bn1(z1)); z2 = conv3x3(a1) + b2 ; partial BN2 stats ----
    z1_img = z1_flat.reshape(N, H, W, Cp)      # halo rows are fetched from this 4-D view
    main_spec = pl.BlockSpec((MT, Cp), lambda i: (i, 0))
    up_spec = pl.BlockSpec(
        (1, 1, W, Cp),
        lambda i: (i // HB, jnp.maximum((i % HB) * TILE_H - 1, 0), 0, 0))
    dn_spec = pl.BlockSpec(
        (1, 1, W, Cp),
        lambda i: (i // HB, jnp.minimum((i % HB + 1) * TILE_H, H - 1), 0, 0))
    vecb_spec = pl.BlockSpec((1, Cp), lambda i: (0, 0))
    w2_spec = pl.BlockSpec((3, 3, Cp, Cp), lambda i: (0, 0, 0, 0))
    stb_spec = pl.BlockSpec((1, 8, Cp), lambda i: (i, 0, 0))

    kernel_b = functools.partial(bn_relu_conv3x3_kernel, W=W, TILE_H=TILE_H, HB=HB,
                                 sh_down=sh_down, sh_up=sh_up)
    z2_flat, st2 = pl.pallas_call(
        kernel_b,
        grid=(N * HB,),
        in_specs=[main_spec, up_spec, dn_spec, vecb_spec, vecb_spec, w2_spec, vecb_spec],
        out_specs=(main_spec, stb_spec),
        out_shape=(jax.ShapeDtypeStruct((M, Cp), sdt),
                   jax.ShapeDtypeStruct((N * HB, 8, Cp), f32)),
        compiler_params=cparams,
    )(z1_flat, z1_img, z1_img, sc1, sh1, w2m, b2r)
    sc2, sh2 = _scale_shift(jnp.sum(st2, axis=0), g2r[0], be2r[0], M)

    # ---- Pass C: a2 = relu(bn2(z2)); z3 = a2 @ W3 + b3 ; partial BN3 stats ----
    z3_flat, st3 = pl.pallas_call(
        bn_relu_conv1x1_stats_kernel,
        grid=(n_tiles,),
        in_specs=[mtile_spec, row_spec, row_spec, mat_spec, row_spec],
        out_specs=(mtile_spec, st_spec),
        out_shape=(jax.ShapeDtypeStruct((M, Cp), sdt),
                   jax.ShapeDtypeStruct((n_tiles, 8, Cp), f32)),
        compiler_params=cparams,
    )(z2_flat, sc2, sh2, w3m, b3r)
    sc3, sh3 = _scale_shift(jnp.sum(st3, axis=0), g3r[0], be3r[0], M)

    # ---- Pass D: out = relu(2 * bn3(z3))  (identity shortcut applied to the left output) ----
    out_flat = pl.pallas_call(
        bn_residual_relu_kernel,
        grid=(n_tiles,),
        in_specs=[mtile_spec, row_spec, row_spec],
        out_specs=mtile_spec,
        out_shape=jax.ShapeDtypeStruct((M, Cp), f32),
        compiler_params=cparams,
    )(z3_flat, sc3, sh3)

    if Cp != C:
        out_flat = out_flat[:, :C]
    out = out_flat.reshape(N, H, W, C)
    return jnp.transpose(out, (0, 3, 1, 2))


# ---------------- pure-JAX reference (sanity check) ----------------
def reference_forward(x, params):
    (w1, b1, g1, be1, w2, b2, g2, be2, w3, b3, g3, be3) = params

    def conv(x, w, b, padding=0):
        y = jax.lax.conv_general_dilated(
            x, w, (1, 1), [(padding, padding), (padding, padding)],
            dimension_numbers=("NCHW", "OIHW", "NCHW"))
        return y + b[None, :, None, None]

    def bn(x, g, be):
        mean = x.mean(axis=(0, 2, 3), keepdims=True)
        var = ((x - mean) ** 2).mean(axis=(0, 2, 3), keepdims=True)
        return (x - mean) / jnp.sqrt(var + EPS) * g[None, :, None, None] + be[None, :, None, None]

    y = jax.nn.relu(bn(conv(x, w1, b1), g1, be1))
    y = jax.nn.relu(bn(conv(y, w2, b2, padding=1), g2, be2))
    y = bn(conv(y, w3, b3), g3, be3)
    y = y + y                       # identity shortcut applied to left-branch output
    return jax.nn.relu(y)


if __name__ == "__main__":
    N, C, H, W = 2, 4, 16, 16       # inchannel == outchannel == 4, stride == 1
    key = jax.random.PRNGKey(0)
    ks = jax.random.split(key, 13)

    x = jax.random.normal(ks[0], (N, C, H, W), jnp.float32)

    w1 = 0.3 * jax.random.normal(ks[1], (C, C, 1, 1), jnp.float32)
    b1 = 0.1 * jax.random.normal(ks[2], (C,), jnp.float32)
    g1 = 1.0 + 0.1 * jax.random.normal(ks[3], (C,), jnp.float32)
    be1 = 0.1 * jax.random.normal(ks[4], (C,), jnp.float32)

    w2 = 0.2 * jax.random.normal(ks[5], (C, C, 3, 3), jnp.float32)
    b2 = 0.1 * jax.random.normal(ks[6], (C,), jnp.float32)
    g2 = 1.0 + 0.1 * jax.random.normal(ks[7], (C,), jnp.float32)
    be2 = 0.1 * jax.random.normal(ks[8], (C,), jnp.float32)

    w3 = 0.3 * jax.random.normal(ks[9], (C, C, 1, 1), jnp.float32)
    b3 = 0.1 * jax.random.normal(ks[10], (C,), jnp.float32)
    g3 = 1.0 + 0.1 * jax.random.normal(ks[11], (C,), jnp.float32)
    be3 = 0.1 * jax.random.normal(ks[12], (C,), jnp.float32)

    params = (w1, b1, g1, be1, w2, b2, g2, be2, w3, b3, g3, be3)

    ref = jax.block_until_ready(reference_forward(x, params))

    # f32 storage: bit-level faithful path (tight tolerance).
    out_f32 = jax.block_until_ready(
        resnet_block_forward(x, params, storage_dtype=jnp.float32))
    assert out_f32.shape == (N, C, H, W)
    err32 = float(jnp.max(jnp.abs(out_f32 - ref)))
    assert jnp.allclose(out_f32, ref, atol=2e-3, rtol=2e-3), err32

    # bf16 storage for intermediates/matmul operands (perf config); f32 math/stats inside.
    out_bf16 = jax.block_until_ready(
        resnet_block_forward(x, params, storage_dtype=jnp.bfloat16))
    assert out_bf16.shape == (N, C, H, W)
    err16 = float(jnp.max(jnp.abs(out_bf16 - ref)))
    assert jnp.allclose(out_bf16, ref, atol=1.5e-1, rtol=1.5e-1), err16

    print("KERNEL_OK")
</pallas_src>

<mosaic_0001>
module attributes {stable_mosaic.version = 11 : i64} {
  func.func @k(%arg0: memref<8x128xf32, #tpu.memory_space<vmem>>, %arg1: memref<8x128xf32, #tpu.memory_space<vmem>>) attributes {dimension_semantics = [], scalar_prefetch = 0 : i64, scratch_operands = 0 : i64, tpu.core_type = #tpu.core_type<tc>} {
    %c0 = arith.constant 0 : index
    %c0_0 = arith.constant 0 : index
    %0 = vector.load %arg0[%c0, %c0_0] : memref<8x128xf32, #tpu.memory_space<vmem>>, vector<8x128xf32>
    %c1_i32 = arith.constant 1 : i32
    %1 = tpu.dynamic_rotate %0 by %c1_i32 dim 0 : vector<8x128xf32>, i32 -> vector<8x128xf32>
    %c0_1 = arith.constant 0 : index
    %c0_2 = arith.constant 0 : index
    %2 = vector.load %arg1[%c0_1, %c0_2] : memref<8x128xf32, #tpu.memory_space<vmem>>, vector<8x128xf32>
    tpu.vector_store %arg1[%c0_1, %c0_2], %1 {strides = array<i32>} : memref<8x128xf32, #tpu.memory_space<vmem>>, vector<8x128xf32>,
    return
  }
}

module attributes {stable_mosaic.version = 11 : i64} {
  func.func @conv1x1_stats_kernel(%arg0: i32, %arg1: memref<256x128xf32, #tpu.memory_space<vmem>>, %arg2: memref<128x128xf32, #tpu.memory_space<vmem>>, %arg3: memref<1x128xf32, #tpu.memory_space<vmem>>, %arg4: memref<256x128xf32, #tpu.memory_space<vmem>>, %arg5: memref<1x8x128xf32, #tpu.memory_space<vmem>>) attributes {dimension_semantics = [#tpu.dimension_semantics<parallel>], iteration_bounds = array<i64: 2>, scalar_prefetch = 0 : i64, scratch_operands = 0 : i64, tpu.core_type = #tpu.core_type<tc>, window_params = [{transform_indices = @transform_0, window_bounds = array<i64: 256, 128>}, {pipeline_mode = #tpu.pipeline_mode<synchronous>, transform_indices = @transform_1, window_bounds = array<i64: 128, 128>}, {pipeline_mode = #tpu.pipeline_mode<synchronous>, transform_indices = @transform_2, window_bounds = array<i64: 1, 128>}, {transform_indices = @transform_3, window_bounds = array<i64: 256, 128>}, {transform_indices = @transform_4, window_bounds = array<i64: 1, 8, 128>}]} {
    %c0 = arith.constant 0 : index
    %c0_0 = arith.constant 0 : index
    %0 = vector.load %arg1[%c0, %c0_0] : memref<256x128xf32, #tpu.memory_space<vmem>>, vector<256x128xf32>
    %c0_1 = arith.constant 0 : index
    %c0_2 = arith.constant 0 : index
    %1 = vector.load %arg2[%c0_1, %c0_2] : memref<128x128xf32, #tpu.memory_space<vmem>>, vector<128x128xf32>
    %cst = arith.constant dense<0.000000e+00> : vector<256x128xf32>
    %2 = tpu.matmul %0, %1, %cst {dimension_numbers = #tpu.dot_dimension_numbers<[1], [0], [0], [1], [0, 0, 1, 1], [], []>} : vector<256x128xf32>, vector<128x128xf32>, vector<256x128xf32> -> vector<256x128xf32>
    %c0_3 = arith.constant 0 : index
    %c0_4 = arith.constant 0 : index
    %3 = vector.load %arg3[%c0_3, %c0_4] : memref<1x128xf32, #tpu.memory_space<vmem>>, vector<1x128xf32>
    %4 = vector.broadcast %3 : vector<1x128xf32> to vector<256x128xf32>
    %5 = arith.addf %2, %4 : vector<256x128xf32>
    %c0_5 = arith.constant 0 : index
    %c0_6 = arith.constant 0 : index
    %6 = vector.load %arg4[%c0_5, %c0_6] : memref<256x128xf32, #tpu.memory_space<vmem>>, vector<256x128xf32>
    tpu.vector_store %arg4[%c0_5, %c0_6], %5 {strides = array<i32>} : memref<256x128xf32, #tpu.memory_space<vmem>>, vector<256x128xf32>,
    %cst_7 = arith.constant dense<0.000000e+00> : vector<128xf32>
    %7 = vector.multi_reduction <add>, %5, %cst_7 [0] : vector<256x128xf32> to vector<128xf32>
    %8 = vector.shape_cast %7 : vector<128xf32> to vector<1x128xf32>
    %9 = arith.mulf %5, %5 : vector<256x128xf32>
    %cst_8 = arith.constant dense<0.000000e+00> : vector<128xf32>
    %10 = vector.multi_reduction <add>, %9, %cst_8 [0] : vector<256x128xf32> to vector<128xf32>
    %11 = vector.shape_cast %10 : vector<128xf32> to vector<1x128xf32>
    %cst_9 = arith.constant 0.000000e+00 : f32
    %12 = vector.broadcast %cst_9 : f32 to vector<6x128xf32>
    %13 = tpu.concatenate %8, %11, %12 in 0 : vector<1x128xf32>, vector<1x128xf32>, vector<6x128xf32> -> vector<8x128xf32>
    %c0_10 = arith.constant 0 : index
    %c0_11 = arith.constant 0 : index
    %c0_12 = arith.constant 0 : index
    %14 = vector.load %arg5[%c0_10, %c0_11, %c0_12] : memref<1x8x128xf32, #tpu.memory_space<vmem>>, vector<1x8x128xf32>
    %15 = vector.shape_cast %14 : vector<1x8x128xf32> to vector<8x128xf32>
    %16 = vector.shape_cast %13 : vector<8x128xf32> to vector<1x8x128xf32>
    tpu.vector_store %arg5[%c0_10, %c0_11, %c0_12], %16 {strides = array<i32>} : memref<1x8x128xf32, #tpu.memory_space<vmem>>, vector<1x8x128xf32>,
    return
  }
  func.func @transform_0(%arg0: i32) -> (i32, i32) {
    %c0_i32 = arith.constant 0 : i32
    %c0_i32_0 = arith.constant 0 : i32
    return %arg0, %c0_i32 : i32, i32
  }
  func.func @transform_1(%arg0: i32) -> (i32, i32) {
    %c0_i32 = arith.constant 0 : i32
    %c0_i32_0 = arith.constant 0 : i32
    %c0_i32_1 = arith.constant 0 : i32
    return %c0_i32, %c0_i32_0 : i32, i32
  }
  func.func @transform_2(%arg0: i32) -> (i32, i32) {
    %c0_i32 = arith.constant 0 : i32
    %c0_i32_0 = arith.constant 0 : i32
    %c0_i32_1 = arith.constant 0 : i32
    return %c0_i32, %c0_i32_0 : i32, i32
  }
  func.func @transform_3(%arg0: i32) -> (i32, i32) {
    %c0_i32 = arith.constant 0 : i32
    %c0_i32_0 = arith.constant 0 : i32
    return %arg0, %c0_i32 : i32, i32
  }
  func.func @transform_4(%arg0: i32) -> (i32, i32, i32) {
    %c0_i32 = arith.constant 0 : i32
    %c0_i32_0 = arith.constant 0 : i32
    %c0_i32_1 = arith.constant 0 : i32
    return %arg0, %c0_i32, %c0_i32_0 : i32, i32, i32
  }
}

</mosaic_0001>

<llo_original>
// kernel: tpu_custom_call.1
$region0: #{tpu_custom_call.1}
  #allocation0 [shape = 'u32[]', space=smem, size = 0x4, offset = 0x4, fixed_abs, tag = 'smem constant byte address 0x4 - core index']
  #allocation1 [shape = 'u32[144,128]{1,0:T(1,128)}', space=vmem, size = 0x12000, scoped, tag = 'internal scratch']
  %s0 = inlined_call_operand.hbm [shape: f32[8,128], index: 0, kind: input, shape index: {}]
  %s1 = inlined_call_operand.hbm [shape: f32[8,128], index: 1, kind: output, shape index: {}]
  %s2 = sld [smem:[#allocation0]]
  $region18: #{tpu_custom_call.1} parent=0
    _
  %s4 = ssub.s32 1, %s2
  %s5 = scalar_select 0, %s4, %s2
  $region1: #{tpu_custom_call.1} parent=0
    #allocation2 [shape = 'u8[4096]{0}', space=vmem, size = 0x1000, scoped, tag = 'input window, operand 0, single buffered']
    #allocation3 [shape = 's32[1]{0}', space=sflag, size = 0x4, scoped, tag = 'scoped memory for tpu_custom_call.1']
    #allocation4 [shape = 's32[1]{0}', space=sflag, size = 0x4, scoped, tag = 'scoped memory for tpu_custom_call.1']
    #allocation5 [shape = 'u8[4096]{0}', space=vmem, size = 0x1000, scoped, tag = 'output window, operand 0, single buffered']
    %6 = vsyncpa [#allocation3], 0
    %7 = vsyncpa [#allocation4], 0
    // Predicated region
    $region2: #{tpu_custom_call.1} parent=1 // pred_check
      _
    $region3: #{tpu_custom_call.1} parent=1 // pred_check_branch
      %9 = sbr.rel (0) target = $region5
    $region4: #{tpu_custom_call.1} parent=1 // pred_region
      %s11 = ssub.s32 128, 128
      %12 = vsyncadd [#allocation3], %s11
      %s14 = sshll.u32 [#allocation2], 4
      %s15 = int_to_ptr.vmem [resolvable:$true] %s14
      %17 = dma.hbm_to_vmem [thread:$0]  %s0, 128, %s15, [#allocation3]
    $region5: #{tpu_custom_call.1} parent=1 // pred_fallthru
      _
    // Predicated region
    $region6: #{tpu_custom_call.1} parent=1 // pred_check
      _
    $region7: #{tpu_custom_call.1} parent=1 // pred_check_branch
      %19 = sbr.rel (0) target = $region9
    $region8: #{tpu_custom_call.1} parent=1 // pred_region
      %20 = dma.done [#allocation3], 128
    $region9: #{tpu_custom_call.1} parent=1 // pred_fallthru
      _
    %v21 = vld [vmem:[#allocation2] sm:$0xff]
    %v22 = vrot.slane %v21, 7
    %23 = vst [vmem:[#allocation5] sm:$0xff] %v22
    // Predicated region
    $region10: #{tpu_custom_call.1} parent=1 // pred_check
      _
    $region11: #{tpu_custom_call.1} parent=1 // pred_check_branch
      %25 = sbr.rel (0) target = $region13
    $region12: #{tpu_custom_call.1} parent=1 // pred_region
      %s27 = ssub.s32 128, 128
      %28 = vsyncadd [#allocation4], %s27
      %s30 = sshll.u32 [#allocation5], 4
      %s31 = int_to_ptr.vmem [resolvable:$true] %s30
      %33 = dma.vmem_to_hbm [thread:$0]  %s31, 128, %s1, [#allocation4]
    $region13: #{tpu_custom_call.1} parent=1 // pred_fallthru
      _
    // Predicated region
    $region14: #{tpu_custom_call.1} parent=1 // pred_check
      _
    $region15: #{tpu_custom_call.1} parent=1 // pred_check_branch
      %35 = sbr.rel (0) target = $region17
    $region16: #{tpu_custom_call.1} parent=1 // pred_region
      %36 = dma.done [#allocation4], 128
    $region17: #{tpu_custom_call.1} parent=1 // pred_fallthru
      _
    %37 = vsyncpa [#allocation3], 1
    %38 = vsyncpa [#allocation4], 1

// kernel: tpu_custom_call.1
$region0: #{tpu_custom_call.1}
  #allocation0 [shape = 'u32[]', space=smem, size = 0x4, offset = 0x4, fixed_abs, tag = 'smem constant byte address 0x4 - core index']
  #allocation1 [shape = 'u32[144,128]{1,0:T(1,128)}', space=vmem, size = 0x12000, scoped, tag = 'internal scratch']
  %s0 = inlined_call_operand.hbm [shape: f32[512,128], index: 0, kind: input, shape index: {}]
  %s1 = inlined_call_operand.hbm [shape: f32[128,128], index: 1, kind: input, shape index: {}]
  %s2 = inlined_call_operand.vmem [shape: f32[1,128], index: 2, kind: input, shape index: {}]
  %s3 = inlined_call_operand.hbm [shape: f32[512,128], index: 3, kind: output, shape index: {0}]
  %s4 = inlined_call_operand.hbm [shape: f32[2,8,128], index: 4, kind: output, shape index: {1}]
  %5 = xla_tuple %s3, %s4
  %s6 = sld [smem:[#allocation0]]
  $region61: #{tpu_custom_call.1} parent=0
    _
  %s8 = ssub.s32 1, %s6
  %s9 = scalar_select 0, %s8, %s6
  $region1: #{tpu_custom_call.1} parent=0
    #allocation2 [shape = 'u8[262144]{0}', space=vmem, size = 0x40000, scoped, tag = 'input window, operand 0']
    #allocation3 [shape = 's32[2]{0}', space=sflag, size = 0x8, scoped, tag = 'scoped memory for tpu_custom_call.1']
    #allocation4 [shape = 's32[2]{0}', space=sflag, size = 0x8, scoped, tag = 'scoped memory for tpu_custom_call.1']
    #allocation5 [shape = 'u8[65536]{0}', space=vmem, size = 0x10000, scoped, tag = 'input window, operand 1, single buffered']
    #allocation6 [shape = 's32[1]{0}', space=sflag, size = 0x4, scoped, tag = 'scoped memory for tpu_custom_call.1']
    #allocation7 [shape = 'u8[262144]{0}', space=vmem, size = 0x40000, scoped, tag = 'output window, operand 0']
    #allocation8 [shape = 'u8[8192]{0}', space=vmem, size = 0x2000, scoped, tag = 'output window, operand 1']
    #allocation9 [shape = 's32[2]{0}', space=sflag, size = 0x8, scoped, tag = 'scoped memory for tpu_custom_call.1']
    %10 = vsyncpa [#allocation3], 0
    %s11 = scalar_lea.sflag [#allocation3], 1
    %12 = vsyncpa %s11, 0
    %13 = vsyncpa [#allocation6], 0
    %14 = vsyncpa [#allocation4], 0
    %s15 = scalar_lea.sflag [#allocation4], 1
    %16 = vsyncpa %s15, 0
    %17 = vsyncpa [#allocation9], 0
    %s18 = scalar_lea.sflag [#allocation9], 1
    %19 = vsyncpa %s18, 0
    loop: start=0, step=1, limit=4
    $region2: #{tpu_custom_call.1} parent=1 // loop_pre_header
      _
    $region3: #{tpu_custom_call.1} parent=1 // loop_header
      %s21 = sphi 0, %s25
      %p22 = scmp.ge.s32.totalorder %s21, 4
      %s31 = sphi 0, %s33
      %s34 = sphi 0, %s31
      %s35 = sphi 0, %s34
      %s51 = sphi 0, %s35
      %s55 = sphi 0, %s55
      %s57 = sphi 0, %s55
      %s58 = sphi 0, %s57
      %s72 = sphi 0, %s58
      %s76 = sphi 0, %s76
      %s78 = sphi 0, %s76
      %s79 = sphi 0, %s78
      %s93 = sphi 0, %s79
      %s99 = sphi 0, %s101
      %s102 = sphi 0, %s99
      %s103 = sphi 0, %s102
      %s119 = sphi 0, %s103
      %s125 = sphi 0, %s127
      %s128 = sphi 0, %s125
      %s129 = sphi 0, %s128
      %s145 = sphi 0, %s129
    $region4: #{tpu_custom_call.1} parent=1 // loop_header_branch
      %24 = sbr.rel (%p22) target = $region8
    $region5: #{tpu_custom_call.1} parent=1 // loop_body
      %s26 = ssub.s32 %s21, 1
      %s27 = ssub.s32 %s21, 2
      %s28 = sadd.s32 %s21, 1
      %s29 = ssub.s32 %s21, %s28
      %p30 = scmp.eq.s32.totalorder %s29, 0
      %s32 = sadd.s32 %s31, 1
      %s33 = scalar_select %p30, %s31, %s32
      %p36 = pneg %p30
      %p37 = scmp.eq.s32.totalorder %s21, 1
      %p38 = por %p36, %p37
      %p39 = scmp.ne.s32.totalorder %s31, %s34
      %p40 = scmp.eq.s32.totalorder %s21, 0
      %p41 = por %p39, %p40
      %p42 = scmp.ne.s32.totalorder %s31, %s34
      %p43 = scmp.eq.s32.totalorder %s26, 1
      %p44 = por %p42, %p43
      %p45 = scmp.ne.s32.totalorder %s34, %s35
      %p46 = scmp.eq.s32.totalorder %s26, 0
      %p47 = por %p45, %p46
      %p48 = scmp.ne.s32.totalorder %s34, %s35
      %p49 = scmp.eq.s32.totalorder %s27, 1
      %p50 = por %p48, %p49
      %p52 = scmp.ne.s32.totalorder %s35, %s51
      %p53 = scmp.eq.s32.totalorder %s27, 0
      %p54 = por %p52, %p53
      %s56 = sadd.s32 %s55, 1
      %p59 = scmp.eq.s32.totalorder %s21, 1
      %p60 = scmp.ne.s32.totalorder %s55, %s57
      %p61 = scmp.eq.s32.totalorder %s21, 0
      %p62 = por %p60, %p61
      %p63 = scmp.ne.s32.totalorder %s55, %s57
      %p64 = scmp.eq.s32.totalorder %s26, 1
      %p65 = por %p63, %p64
      %p66 = scmp.ne.s32.totalorder %s57, %s58
      %p67 = scmp.eq.s32.totalorder %s26, 0
      %p68 = por %p66, %p67
      %p69 = scmp.ne.s32.totalorder %s57, %s58
      %p70 = scmp.eq.s32.totalorder %s27, 1
      %p71 = por %p69, %p70
      %p73 = scmp.ne.s32.totalorder %s58, %s72
      %p74 = scmp.eq.s32.totalorder %s27, 0
      %p75 = por %p73, %p74
      %s77 = sadd.s32 %s76, 1
      %p80 = scmp.eq.s32.totalorder %s21, 1
      %p81 = scmp.ne.s32.totalorder %s76, %s78
      %p82 = scmp.eq.s32.totalorder %s21, 0
      %p83 = por %p81, %p82
      %p84 = scmp.ne.s32.totalorder %s76, %s78
      %p85 = scmp.eq.s32.totalorder %s26, 1
      %p86 = por %p84, %p85
      %p87 = scmp.ne.s32.totalorder %s78, %s79
      %p88 = scmp.eq.s32.totalorder %s26, 0
      %p89 = por %p87, %p88
      %p90 = scmp.ne.s32.totalorder %s78, %s79
      %p91 = scmp.eq.s32.totalorder %s27, 1
      %p92 = por %p90, %p91
      %p94 = scmp.ne.s32.totalorder %s79, %s93
      %p95 = scmp.eq.s32.totalorder %s27, 0
      %p96 = por %p94, %p95
      %s97 = ssub.s32 %s21, %s28
      %p98 = scmp.eq.s32.totalorder %s97, 0
      %s100 = sadd.s32 %s99, 1
      %s101 = scalar_select %p98, %s99, %s100
      %p104 = pneg %p98
      %p105 = scmp.eq.s32.totalorder %s21, 1
      %p106 = por %p104, %p105
      %p107 = scmp.ne.s32.totalorder %s99, %s102
      %p108 = scmp.eq.s32.totalorder %s21, 0
      %p109 = por %p107, %p108
      %p110 = scmp.ne.s32.totalorder %s99, %s102
      %p111 = scmp.eq.s32.totalorder %s26, 1
      %p112 = por %p110, %p111
      %p113 = scmp.ne.s32.totalorder %s102, %s103
      %p114 = scmp.eq.s32.totalorder %s26, 0
      %p115 = por %p113, %p114
      %p116 = scmp.ne.s32.totalorder %s102, %s103
      %p117 = scmp.eq.s32.totalorder %s27, 1
      %p118 = por %p116, %p117
      %p120 = scmp.ne.s32.totalorder %s103, %s119
      %p121 = scmp.eq.s32.totalorder %s27, 0
      %p122 = por %p120, %p121
      %s123 = ssub.s32 %s21, %s28
      %p124 = scmp.eq.s32.totalorder %s123, 0
      %s126 = sadd.s32 %s125, 1
      %s127 = scalar_select %p124, %s125, %s126
      %p130 = pneg %p124
      %p131 = scmp.eq.s32.totalorder %s21, 1
      %p132 = por %p130, %p131
      %p133 = scmp.ne.s32.totalorder %s125, %s128
      %p134 = scmp.eq.s32.totalorder %s21, 0
      %p135 = por %p133, %p134
      %p136 = scmp.ne.s32.totalorder %s125, %s128
      %p137 = scmp.eq.s32.totalorder %s26, 1
      %p138 = por %p136, %p137
      %p139 = scmp.ne.s32.totalorder %s128, %s129
      %p140 = scmp.eq.s32.totalorder %s26, 0
      %p141 = por %p139, %p140
      %p142 = scmp.ne.s32.totalorder %s128, %s129
      %p143 = scmp.eq.s32.totalorder %s27, 1
      %p144 = por %p142, %p143
      %p146 = scmp.ne.s32.totalorder %s129, %s145
      %p147 = scmp.eq.s32.totalorder %s27, 0
      %p148 = por %p146, %p147
      %p149 = scmp.le.s32.totalorder 1, %s21
      %p150 = scmp.lt.s32.totalorder %s21, 3
      %p151 = pnand %p149, %p150
      %p152 = pneg %p151
      // Predicated region
      $region9: #{tpu_custom_call.1} parent=5 // pred_check
        _
      $region10: #{tpu_custom_call.1} parent=5 // pred_check_branch
        %154 = sbr.rel (%p151) target = $region12
      $region11: #{tpu_custom_call.1} parent=5 // pred_region
        %s155 = ssub.s32 %s21, 1
        // Predicated region
        $region13: #{tpu_custom_call.1} parent=11 // pred_check
          %p156 = pneg %p68
        $region14: #{tpu_custom_call.1} parent=11 // pred_check_branch
          %158 = sbr.rel (%p156) target = $region16
        $region15: #{tpu_custom_call.1} parent=11 // pred_region
          %s160 = ssub.s32 2048, 2048
          %161 = vsyncadd [#allocation6], %s160
          %s162 = sshll.u32 [#allocation5], 4
          %s163 = int_to_ptr.vmem [resolvable:$true] %s162
          %168 = dma.hbm_to_vmem [thread:$0]  %s1, 2048, %s163, [#allocation6], 128, 128, 8
        $region16: #{tpu_custom_call.1} parent=11 // pred_fallthru
          _
        // Predicated region
        $region17: #{tpu_custom_call.1} parent=11 // pred_check
          %p169 = pneg %p89
        $region18: #{tpu_custom_call.1} parent=11 // pred_check_branch
          %171 = sbr.rel (%p169) target = $region20
        $region19: #{tpu_custom_call.1} parent=11 // pred_region
          _
        $region20: #{tpu_custom_call.1} parent=11 // pred_fallthru
          _
      $region12: #{tpu_custom_call.1} parent=5 // pred_fallthru
        _
      %p172 = scmp.lt.s32.totalorder %s21, 2
      // Predicated region
      $region21: #{tpu_custom_call.1} parent=5 // pred_check
        %p173 = pneg %p172
      $region22: #{tpu_custom_call.1} parent=5 // pred_check_branch
        %175 = sbr.rel (%p173) target = $region24
      $region23: #{tpu_custom_call.1} parent=5 // pred_region
        // Predicated region
        $region25: #{tpu_custom_call.1} parent=23 // pred_check
          %p176 = pneg %p41
        $region26: #{tpu_custom_call.1} parent=23 // pred_check_branch
          %178 = sbr.rel (%p176) target = $region28
        $region27: #{tpu_custom_call.1} parent=23 // pred_region
          %s179 = sand.u32 %s31, 1
          %s180 = scalar_lea.sflag [#allocation3], %s179
          %s181 = sand.u32 %s31, 1
          %s182 = smul.addr %s181, 256
          %s183 = scalar_lea.vmem [#allocation2], %s182
          %s184 = smul.u32 32, %s21
          %s186 = ssub.s32 4096, 4096
          %187 = vsyncadd %s180, %s186
          %s188 = smul.addr %s184, 128
          %s189 = scalar_lea.hbm %s0, %s188
          %s190 = sshll.u32 %s183, 4
          %s191 = int_to_ptr.vmem [resolvable:$true] %s190
          %196 = dma.hbm_to_vmem [thread:$0]  %s189, 4096, %s191, %s180, 128, 128, 8
        $region28: #{tpu_custom_call.1} parent=23 // pred_fallthru
          _
      $region24: #{tpu_custom_call.1} parent=5 // pred_fallthru
        _
      %p197 = scmp.le.s32.totalorder 1, %s21
      %p198 = scmp.lt.s32.totalorder %s21, 3
      %p199 = pnand %p197, %p198
      %p200 = pneg %p199
      // Predicated region
      $region29: #{tpu_custom_call.1} parent=5 // pred_check
        _
      $region30: #{tpu_custom_call.1} parent=5 // pred_check_branch
        %202 = sbr.rel (%p199) target = $region32
      $region31: #{tpu_custom_call.1} parent=5 // pred_region
        %s203 = ssub.s32 %s21, 1
        %s204 = sand.u32 %s34, 1
        %s205 = scalar_lea.sflag [#allocation3], %s204
        %s206 = sand.u32 %s34, 1
        %s207 = smul.addr %s206, 256
        %s208 = scalar_lea.vmem [#allocation2], %s207
        // Predicated region
        $region33: #{tpu_custom_call.1} parent=31 // pred_check
          %p209 = pneg %p47
        $region34: #{tpu_custom_call.1} parent=31 // pred_check_branch
          %211 = sbr.rel (%p209) target = $region36
        $region35: #{tpu_custom_call.1} parent=31 // pred_region
          %212 = dma.done %s205, 4096
        $region36: #{tpu_custom_call.1} parent=31 // pred_fallthru
          _
        // Predicated region
        $region37: #{tpu_custom_call.1} parent=31 // pred_check
          %p213 = pneg %p68
        $region38: #{tpu_custom_call.1} parent=31 // pred_check_branch
          %215 = sbr.rel (%p213) target = $region40
        $region39: #{tpu_custom_call.1} parent=31 // pred_region
          %216 = dma.done [#allocation6], 2048
        $region40: #{tpu_custom_call.1} parent=31 // pred_fallthru
          _
        %s217 = sand.u32 %s34, 1
        %s218 = scalar_lea.sflag [#allocation3], %s217
        %s219 = sand.u32 %s34, 1
        %s220 = smul.addr %s219, 256
        %s221 = scalar_lea.vmem [#allocation2], %s220
        %p222 = pneg %p47
        %p223 = pneg %p44
        %p224 = pneg %p68
        %p225 = pneg %p65
        %p226 = pneg %p89
        %p227 = pneg %p86
        %p228 = pneg %p115
        %p229 = pneg %p112
        %s230 = sand.u32 %s102, 1
        %s231 = scalar_lea.sflag [#allocation4], %s230
        %s232 = sand.u32 %s102, 1
        %s233 = smul.addr %s232, 256
        %s234 = scalar_lea.vmem [#allocation7], %s233
        %p235 = pneg %p141
        %p236 = pneg %p138
        %s237 = sand.u32 %s128, 1
        %s238 = scalar_lea.sflag [#allocation9], %s237
        %s239 = sand.u32 %s128, 1
        %s240 = smul.addr %s239, 8
        %s241 = scalar_lea.vmem [#allocation8], %s240
        %s242 = smul.u32 32, %s26
        %s243 = smul.u32 32, %s26
        %v244 = vld [vmem:[%s208] sm:$0xff]
        %v245 = vld [vmem:[%s208 + $0x8] sm:$0xff]
        %v246 = vld [vmem:[%s208 + $0x10] sm:$0xff]
        %v247 = vld [vmem:[%s208 + $0x18] sm:$0xff]
        %v248 = vld [vmem:[%s208 + $0x20] sm:$0xff]
        %v249 = vld [vmem:[%s208 + $0x28] sm:$0xff]
        %v250 = vld [vmem:[%s208 + $0x30] sm:$0xff]
        %v251 = vld [vmem:[%s208 + $0x38] sm:$0xff]
        %v252 = vld [vmem:[%s208 + $0x40] sm:$0xff]
        %v253 = vld [vmem:[%s208 + $0x48] sm:$0xff]
        %v254 = vld [vmem:[%s208 + $0x50] sm:$0xff]
        %v255 = vld [vmem:[%s208 + $0x58] sm:$0xff]
        %v256 = vld [vmem:[%s208 + $0x60] sm:$0xff]
        %v257 = vld [vmem:[%s208 + $0x68] sm:$0xff]
        %v258 = vld [vmem:[%s208 + $0x70] sm:$0xff]
        %v259 = vld [vmem:[%s208 + $0x78] sm:$0xff]
        %v260 = vld [vmem:[%s208 + $0x80] sm:$0xff]
        %v261 = vld [vmem:[%s208 + $0x88] sm:$0xff]
        %v262 = vld [vmem:[%s208 + $0x90] sm:$0xff]
        %v263 = vld [vmem:[%s208 + $0x98] sm:$0xff]
        %v264 = vld [vmem:[%s208 + $0xa0] sm:$0xff]
        %v265 = vld [vmem:[%s208 + $0xa8] sm:$0xff]
        %v266 = vld [vmem:[%s208 + $0xb0] sm:$0xff]
        %v267 = vld [vmem:[%s208 + $0xb8] sm:$0xff]
        %v268 = vld [vmem:[%s208 + $0xc0] sm:$0xff]
        %v269 = vld [vmem:[%s208 + $0xc8] sm:$0xff]
        %v270 = vld [vmem:[%s208 + $0xd0] sm:$0xff]
        %v271 = vld [vmem:[%s208 + $0xd8] sm:$0xff]
        %v272 = vld [vmem:[%s208 + $0xe0] sm:$0xff]
        %v273 = vld [vmem:[%s208 + $0xe8] sm:$0xff]
        %v274 = vld [vmem:[%s208 + $0xf0] sm:$0xff]
        %v275 = vld [vmem:[%s208 + $0xf8] sm:$0xff]
        %v276 = vld [vmem:[#allocation5] sm:$0xff]
        %v277 = vld [vmem:[#allocation5 + $0x8] sm:$0xff]
        %v278 = vld [vmem:[#allocation5 + $0x10] sm:$0xff]
        %v279 = vld [vmem:[#allocation5 + $0x18] sm:$0xff]
        %v280 = vld [vmem:[#allocation5 + $0x20] sm:$0xff]
        %v281 = vld [vmem:[#allocation5 + $0x28] sm:$0xff]
        %v282 = vld [vmem:[#allocation5 + $0x30] sm:$0xff]
        %v283 = vld [vmem:[#allocation5 + $0x38] sm:$0xff]
        %v284 = vld [vmem:[#allocation5 + $0x40] sm:$0xff]
        %v285 = vld [vmem:[#allocation5 + $0x48] sm:$0xff]
        %v286 = vld [vmem:[#allocation5 + $0x50] sm:$0xff]
        %v287 = vld [vmem:[#allocation5 + $0x58] sm:$0xff]
        %v288 = vld [vmem:[#allocation5 + $0x60] sm:$0xff]
        %v289 = vld [vmem:[#allocation5 + $0x68] sm:$0xff]
        %v290 = vld [vmem:[#allocation5 + $0x70] sm:$0xff]
        %v291 = vld [vmem:[#allocation5 + $0x78] sm:$0xff]
        %v292 = vld [vmem:[%s2] sm:$0x1]
        %v294 = vlaneseq
        %v295 = vshrl.u32 %v294, 7
        %v296 = vsub.s32 0, %v295
        %v297 = vrot.slane %v292, %v296
        %299 = vmatprep.subr.mxu0 0.0
        %300 = vmatpush1.msra.mxu0 %v276
        %301 = vmatprep.subr.mxu0 0.0
        %302 = vmatpush1.msra.mxu0 %v277
        %303 = vmatprep.subr.mxu0 0.0
        %304 = vmatpush1.msra.mxu0 %v278
        %305 = vmatprep.subr.mxu0 0.0
        %306 = vmatpush1.msra.mxu0 %v279
        %307 = vmatprep.subr.mxu0 0.0
        %308 = vmatpush1.msra.mxu0 %v280
        %309 = vmatprep.subr.mxu0 0.0
        %310 = vmatpush1.msra.mxu0 %v281
        %311 = vmatprep.subr.mxu0 0.0
        %312 = vmatpush1.msra.mxu0 %v282
        %313 = vmatprep.subr.mxu0 0.0
        %314 = vmatpush1.msra.mxu0 %v283
        %315 = vmatprep.subr.mxu0 0.0
        %316 = vmatpush1.msra.mxu0 %v284
        %317 = vmatprep.subr.mxu0 0.0
        %318 = vmatpush1.msra.mxu0 %v285
        %319 = vmatprep.subr.mxu0 0.0
        %320 = vmatpush1.msra.mxu0 %v286
        %321 = vmatprep.subr.mxu0 0.0
        %322 = vmatpush1.msra.mxu0 %v287
        %323 = vmatprep.subr.mxu0 0.0
        %324 = vmatpush1.msra.mxu0 %v288
        %325 = vmatprep.subr.mxu0 0.0
        %326 = vmatpush1.msra.mxu0 %v289
        %327 = vmatprep.subr.mxu0 0.0
        %328 = vmatpush1.msra.mxu0 %v290
        %329 = vmatprep.subr.mxu0 0.0
        %330 = vmatpush1.msra.mxu0 %v291
        %331 = vmatprep.subr.mxu0 0.0
        %332 = vmatpush1.msra.mxu0 0.0
        %333 = vmatprep.subr.mxu0 0.0
        %334 = vmatpush1.msra.mxu0 0.0
        %335 = vmatprep.subr.mxu0 0.0
        %336 = vmatpush1.msra.mxu0 0.0
        %337 = vmatprep.subr.mxu0 0.0
        %338 = vmatpush1.msra.mxu0 0.0
        %339 = vmatprep.subr.mxu0 0.0
        %340 = vmatpush1.msra.mxu0 0.0
        %341 = vmatprep.subr.mxu0 0.0
        %342 = vmatpush1.msra.mxu0 0.0
        %343 = vmatprep.subr.mxu0 0.0
        %344 = vmatpush1.msra.mxu0 0.0
        %345 = vmatprep.subr.mxu0 0.0
        %346 = vmatpush1.msra.mxu0 0.0
        %347 = vmatprep.subr.mxu0 0.0
        %348 = vmatpush1.msra.mxu0 0.0
        %349 = vmatprep.subr.mxu0 0.0
        %350 = vmatpush1.msra.mxu0 0.0
        %351 = vmatprep.subr.mxu0 0.0
        %352 = vmatpush1.msra.mxu0 0.0
        %353 = vmatprep.subr.mxu0 0.0
        %354 = vmatpush1.msra.mxu0 0.0
        %355 = vmatprep.subr.mxu0 0.0
        %356 = vmatpush1.msra.mxu0 0.0
        %357 = vmatprep.subr.mxu0 0.0
        %358 = vmatpush1.msra.mxu0 0.0
        %359 = vmatprep.subr.mxu0 0.0
        %360 = vmatpush1.msra.mxu0 0.0
        %361 = vmatprep.subr.mxu0 0.0
        %362 = vmatpush1.msra.mxu0 0.0
        %363 = vmatprep.mubr.f32.mxu0 0.0
        %364 = vmatmul.mubr.f32.gmra.mrb[0].mxu0 %v244
        %v365 = vpop.f32.mrb[0].mxu0
        %v366 = vadd.f32 %v297, %v365
        %v367 = vpop.f32.mrb[0].mxu0
        %368 = vmatprep.mubr.f32.mxu0 0.0
        %369 = vmatmul.mubr.f32.gmra.mrb[0].mxu0 %v245
        %v370 = vpop.f32.mrb[0].mxu0
        %v371 = vadd.f32 %v297, %v370
        %v372 = vpop.f32.mrb[0].mxu0
        %373 = vmatprep.mubr.f32.mxu0 0.0
        %374 = vmatmul.mubr.f32.gmra.mrb[0].mxu0 %v246
        %v375 = vpop.f32.mrb[0].mxu0
        %v376 = vadd.f32 %v297, %v375
        %v377 = vpop.f32.mrb[0].mxu0
        %378 = vmatprep.mubr.f32.mxu0 0.0
        %379 = vmatmul.mubr.f32.gmra.mrb[0].mxu0 %v247
        %v380 = vpop.f32.mrb[0].mxu0
        %v381 = vadd.f32 %v297, %v380
        %v382 = vpop.f32.mrb[0].mxu0
        %383 = vmatprep.mubr.f32.mxu0 0.0
        %384 = vmatmul.mubr.f32.gmra.mrb[0].mxu0 %v248
        %v385 = vpop.f32.mrb[0].mxu0
        %v386 = vadd.f32 %v297, %v385
        %v387 = vpop.f32.mrb[0].mxu0
        %388 = vmatprep.mubr.f32.mxu0 0.0
        %389 = vmatmul.mubr.f32.gmra.mrb[0].mxu0 %v249
        %v390 = vpop.f32.mrb[0].mxu0
        %v391 = vadd.f32 %v297, %v390
        %v392 = vpop.f32.mrb[0].mxu0
        %393 = vmatprep.mubr.f32.mxu0 0.0
        %394 = vmatmul.mubr.f32.gmra.mrb[0].mxu0 %v250
        %v395 = vpop.f32.mrb[0].mxu0
        %v396 = vadd.f32 %v297, %v395
        %v397 = vpop.f32.mrb[0].mxu0
        %398 = vmatprep.mubr.f32.mxu0 0.0
        %399 = vmatmul.mubr.f32.gmra.mrb[0].mxu0 %v251
        %v400 = vpop.f32.mrb[0].mxu0
        %v401 = vadd.f32 %v297, %v400
        %v402 = vpop.f32.mrb[0].mxu0
        %403 = vmatprep.mubr.f32.mxu0 0.0
        %404 = vmatmul.mubr.f32.gmra.mrb[0].mxu0 %v252
        %v405 = vpop.f32.mrb[0].mxu0
        %v406 = vadd.f32 %v297, %v405
        %v407 = vpop.f32.mrb[0].mxu0
        %408 = vmatprep.mubr.f32.mxu0 0.0
        %409 = vmatmul.mubr.f32.gmra.mrb[0].mxu0 %v253
        %v410 = vpop.f32.mrb[0].mxu0
        %v411 = vadd.f32 %v297, %v410
        %v412 = vpop.f32.mrb[0].mxu0
        %413 = vmatprep.mubr.f32.mxu0 0.0
        %414 = vmatmul.mubr.f32.gmra.mrb[0].mxu0 %v254
        %v415 = vpop.f32.mrb[0].mxu0
        %v416 = vadd.f32 %v297, %v415
        %v417 = vpop.f32.mrb[0].mxu0
        %418 = vmatprep.mubr.f32.mxu0 0.0
        %419 = vmatmul.mubr.f32.gmra.mrb[0].mxu0 %v255
        %v420 = vpop.f32.mrb[0].mxu0
        %v421 = vadd.f32 %v297, %v420
        %v422 = vpop.f32.mrb[0].mxu0
        %423 = vmatprep.mubr.f32.mxu0 0.0
        %424 = vmatmul.mubr.f32.gmra.mrb[0].mxu0 %v256
        %v425 = vpop.f32.mrb[0].mxu0
        %v426 = vadd.f32 %v297, %v425
        %v427 = vpop.f32.mrb[0].mxu0
        %428 = vmatprep.mubr.f32.mxu0 0.0
        %429 = vmatmul.mubr.f32.gmra.mrb[0].mxu0 %v257
        %v430 = vpop.f32.mrb[0].mxu0
        %v431 = vadd.f32 %v297, %v430
        %v432 = vpop.f32.mrb[0].mxu0
        %433 = vmatprep.mubr.f32.mxu0 0.0
        %434 = vmatmul.mubr.f32.gmra.mrb[0].mxu0 %v258
        %v435 = vpop.f32.mrb[0].mxu0
        %v436 = vadd.f32 %v297, %v435
        %v437 = vpop.f32.mrb[0].mxu0
        %438 = vmatprep.mubr.f32.mxu0 0.0
        %439 = vmatmul.mubr.f32.gmra.mrb[0].mxu0 %v259
        %v440 = vpop.f32.mrb[0].mxu0
        %v441 = vadd.f32 %v297, %v440
        %v442 = vpop.f32.mrb[0].mxu0
        %443 = vmatprep.mubr.f32.mxu0 0.0
        %444 = vmatmul.mubr.f32.gmra.mrb[0].mxu0 %v260
        %v445 = vpop.f32.mrb[0].mxu0
        %v446 = vadd.f32 %v297, %v445
        %v447 = vpop.f32.mrb[0].mxu0
        %448 = vmatprep.mubr.f32.mxu0 0.0
        %449 = vmatmul.mubr.f32.gmra.mrb[0].mxu0 %v261
        %v450 = vpop.f32.mrb[0].mxu0
        %v451 = vadd.f32 %v297, %v450
        %v452 = vpop.f32.mrb[0].mxu0
        %453 = vmatprep.mubr.f32.mxu0 0.0
        %454 = vmatmul.mubr.f32.gmra.mrb[0].mxu0 %v262
        %v455 = vpop.f32.mrb[0].mxu0
        %v456 = vadd.f32 %v297, %v455
        %v457 = vpop.f32.mrb[0].mxu0
        %458 = vmatprep.mubr.f32.mxu0 0.0
        %459 = vmatmul.mubr.f32.gmra.mrb[0].mxu0 %v263
        %v460 = vpop.f32.mrb[0].mxu0
        %v461 = vadd.f32 %v297, %v460
        %v462 = vpop.f32.mrb[0].mxu0
        %463 = vmatprep.mubr.f32.mxu0 0.0
        %464 = vmatmul.mubr.f32.gmra.mrb[0].mxu0 %v264
        %v465 = vpop.f32.mrb[0].mxu0
        %v466 = vadd.f32 %v297, %v465
        %v467 = vpop.f32.mrb[0].mxu0
        %468 = vmatprep.mubr.f32.mxu0 0.0
        %469 = vmatmul.mubr.f32.gmra.mrb[0].mxu0 %v265
        %v470 = vpop.f32.mrb[0].mxu0
        %v471 = vadd.f32 %v297, %v470
        %v472 = vpop.f32.mrb[0].mxu0
        %473 = vmatprep.mubr.f32.mxu0 0.0
        %474 = vmatmul.mubr.f32.gmra.mrb[0].mxu0 %v266
        %v475 = vpop.f32.mrb[0].mxu0
        %v476 = vadd.f32 %v297, %v475
        %v477 = vpop.f32.mrb[0].mxu0
        %478 = vmatprep.mubr.f32.mxu0 0.0
        %479 = vmatmul.mubr.f32.gmra.mrb[0].mxu0 %v267
        %v480 = vpop.f32.mrb[0].mxu0
        %v481 = vadd.f32 %v297, %v480
        %v482 = vpop.f32.mrb[0].mxu0
        %483 = vmatprep.mubr.f32.mxu0 0.0
        %484 = vmatmul.mubr.f32.gmra.mrb[0].mxu0 %v268
        %v485 = vpop.f32.mrb[0].mxu0
        %v486 = vadd.f32 %v297, %v485
        %v487 = vpop.f32.mrb[0].mxu0
        %488 = vmatprep.mubr.f32.mxu0 0.0
        %489 = vmatmul.mubr.f32.gmra.mrb[0].mxu0 %v269
        %v490 = vpop.f32.mrb[0].mxu0
        %v491 = vadd.f32 %v297, %v490
        %v492 = vpop.f32.mrb[0].mxu0
        %493 = vmatprep.mubr.f32.mxu0 0.0
        %494 = vmatmul.mubr.f32.gmra.mrb[0].mxu0 %v270
        %v495 = vpop.f32.mrb[0].mxu0
        %v496 = vadd.f32 %v297, %v495
        %v497 = vpop.f32.mrb[0].mxu0
        %498 = vmatprep.mubr.f32.mxu0 0.0
        %499 = vmatmul.mubr.f32.gmra.mrb[0].mxu0 %v271
        %v500 = vpop.f32.mrb[0].mxu0
        %v501 = vadd.f32 %v297, %v500
        %v502 = vpop.f32.mrb[0].mxu0
        %503 = vmatprep.mubr.f32.mxu0 0.0
        %504 = vmatmul.mubr.f32.gmra.mrb[0].mxu0 %v272
        %v505 = vpop.f32.mrb[0].mxu0
        %v506 = vadd.f32 %v297, %v505
        %v507 = vpop.f32.mrb[0].mxu0
        %508 = vmatprep.mubr.f32.mxu0 0.0
        %509 = vmatmul.mubr.f32.gmra.mrb[0].mxu0 %v273
        %v510 = vpop.f32.mrb[0].mxu0
        %v511 = vadd.f32 %v297, %v510
        %v512 = vpop.f32.mrb[0].mxu0
        %513 = vmatprep.mubr.f32.mxu0 0.0
        %514 = vmatmul.mubr.f32.gmra.mrb[0].mxu0 %v274
        %v515 = vpop.f32.mrb[0].mxu0
        %v516 = vadd.f32 %v297, %v515
        %v517 = vpop.f32.mrb[0].mxu0
        %518 = vmatprep.mubr.f32.mxu0 0.0
        %519 = vmatmul.mubr.f32.gmra.mrb[0].mxu0 %v275
        %v520 = vpop.f32.mrb[0].mxu0
        %v521 = vadd.f32 %v297, %v520
        %v522 = vpop.f32.mrb[0].mxu0
        %523 = vdwg.mxu0
        %524 = vst [vmem:[%s234] sm:$0xff] %v366
        %525 = vst [vmem:[%s234 + $0x8] sm:$0xff] %v371
        %526 = vst [vmem:[%s234 + $0x10] sm:$0xff] %v376
        %527 = vst [vmem:[%s234 + $0x18] sm:$0xff] %v381
        %528 = vst [vmem:[%s234 + $0x20] sm:$0xff] %v386
        %529 = vst [vmem:[%s234 + $0x28] sm:$0xff] %v391
        %530 = vst [vmem:[%s234 + $0x30] sm:$0xff] %v396
        %531 = vst [vmem:[%s234 + $0x38] sm:$0xff] %v401
        %532 = vst [vmem:[%s234 + $0x40] sm:$0xff] %v406
        %533 = vst [vmem:[%s234 + $0x48] sm:$0xff] %v411
        %534 = vst [vmem:[%s234 + $0x50] sm:$0xff] %v416
        %535 = vst [vmem:[%s234 + $0x58] sm:$0xff] %v421
        %536 = vst [vmem:[%s234 + $0x60] sm:$0xff] %v426
        %537 = vst [vmem:[%s234 + $0x68] sm:$0xff] %v431
        %538 = vst [vmem:[%s234 + $0x70] sm:$0xff] %v436
        %539 = vst [vmem:[%s234 + $0x78] sm:$0xff] %v441
        %540 = vst [vmem:[%s234 + $0x80] sm:$0xff] %v446
        %541 = vst [vmem:[%s234 + $0x88] sm:$0xff] %v451
        %542 = vst [vmem:[%s234 + $0x90] sm:$0xff] %v456
        %543 = vst [vmem:[%s234 + $0x98] sm:$0xff] %v461
        %544 = vst [vmem:[%s234 + $0xa0] sm:$0xff] %v466
        %545 = vst [vmem:[%s234 + $0xa8] sm:$0xff] %v471
        %546 = vst [vmem:[%s234 + $0xb0] sm:$0xff] %v476
        %547 = vst [vmem:[%s234 + $0xb8] sm:$0xff] %v481
        %548 = vst [vmem:[%s234 + $0xc0] sm:$0xff] %v486
        %549 = vst [vmem:[%s234 + $0xc8] sm:$0xff] %v491
        %550 = vst [vmem:[%s234 + $0xd0] sm:$0xff] %v496
        %551 = vst [vmem:[%s234 + $0xd8] sm:$0xff] %v501
        %552 = vst [vmem:[%s234 + $0xe0] sm:$0xff] %v506
        %553 = vst [vmem:[%s234 + $0xe8] sm:$0xff] %v511
        %554 = vst [vmem:[%s234 + $0xf0] sm:$0xff] %v516
        %555 = vst [vmem:[%s234 + $0xf8] sm:$0xff] %v521
        %v556 = vadd.f32 %v366, %v371
        %v557 = vadd.f32 %v556, %v376
        %v558 = vadd.f32 %v557, %v381
        %v559 = vadd.f32 %v558, %v386
        %v560 = vadd.f32 %v559, %v391
        %v561 = vadd.f32 %v560, %v396
        %v562 = vadd.f32 %v561, %v401
        %v563 = vadd.f32 %v562, %v406
        %v564 = vadd.f32 %v563, %v411
        %v565 = vadd.f32 %v564, %v416
        %v566 = vadd.f32 %v565, %v421
        %v567 = vadd.f32 %v566, %v426
        %v568 = vadd.f32 %v567, %v431
        %v569 = vadd.f32 %v568, %v436
        %v570 = vadd.f32 %v569, %v441
        %v571 = vadd.f32 %v570, %v446
        %v572 = vadd.f32 %v571, %v451
        %v573 = vadd.f32 %v572, %v456
        %v574 = vadd.f32 %v573, %v461
        %v575 = vadd.f32 %v574, %v466
        %v576 = vadd.f32 %v575, %v471
        %v577 = vadd.f32 %v576, %v476
        %v578 = vadd.f32 %v577, %v481
        %v579 = vadd.f32 %v578, %v486
        %v580 = vadd.f32 %v579, %v491
        %v581 = vadd.f32 %v580, %v496
        %v582 = vadd.f32 %v581, %v501
        %v583 = vadd.f32 %v582, %v506
        %v584 = vadd.f32 %v583, %v511
        %v585 = vadd.f32 %v584, %v516
        %v586 = vadd.f32 %v585, %v521
        %v587 = vrot.slane %v586, 4
        %v588 = vadd.f32 %v586, %v587
        %v589 = vrot.slane %v588, 2
        %v590 = vadd.f32 %v588, %v589
        %v591 = vrot.slane %v590, 1
        %v592 = vadd.f32 %v590, %v591
        %v593 = vmul.f32 %v366, %v366
        %v594 = vmul.f32 %v371, %v371
        %v595 = vmul.f32 %v376, %v376
        %v596 = vmul.f32 %v381, %v381
        %v597 = vmul.f32 %v386, %v386
        %v598 = vmul.f32 %v391, %v391
        %v599 = vmul.f32 %v396, %v396
        %v600 = vmul.f32 %v401, %v401
        %v601 = vmul.f32 %v406, %v406
        %v602 = vmul.f32 %v411, %v411
        %v603 = vmul.f32 %v416, %v416
        %v604 = vmul.f32 %v421, %v421
        %v605 = vmul.f32 %v426, %v426
        %v606 = vmul.f32 %v431, %v431
        %v607 = vmul.f32 %v436, %v436
        %v608 = vmul.f32 %v441, %v441
        %v609 = vmul.f32 %v446, %v446
        %v610 = vmul.f32 %v451, %v451
        %v611 = vmul.f32 %v456, %v456
        %v612 = vmul.f32 %v461, %v461
        %v613 = vmul.f32 %v466, %v466
        %v614 = vmul.f32 %v471, %v471
        %v615 = vmul.f32 %v476, %v476
        %v616 = vmul.f32 %v481, %v481
        %v617 = vmul.f32 %v486, %v486
        %v618 = vmul.f32 %v491, %v491
        %v619 = vmul.f32 %v496, %v496
        %v620 = vmul.f32 %v501, %v501
        %v621 = vmul.f32 %v506, %v506
        %v622 = vmul.f32 %v511, %v511
        %v623 = vmul.f32 %v516, %v516
        %v624 = vmul.f32 %v521, %v521
        %v625 = vadd.f32 %v593, %v594
        %v626 = vadd.f32 %v625, %v595
        %v627 = vadd.f32 %v626, %v596
        %v628 = vadd.f32 %v627, %v597
        %v629 = vadd.f32 %v628, %v598
        %v630 = vadd.f32 %v629, %v599
        %v631 = vadd.f32 %v630, %v600
        %v632 = vadd.f32 %v631, %v601
        %v633 = vadd.f32 %v632, %v602
        %v634 = vadd.f32 %v633, %v603
        %v635 = vadd.f32 %v634, %v604
        %v636 = vadd.f32 %v635, %v605
        %v637 = vadd.f32 %v636, %v606
        %v638 = vadd.f32 %v637, %v607
        %v639 = vadd.f32 %v638, %v608
        %v640 = vadd.f32 %v639, %v609
        %v641 = vadd.f32 %v640, %v610
        %v642 = vadd.f32 %v641, %v611
        %v643 = vadd.f32 %v642, %v612
        %v644 = vadd.f32 %v643, %v613
        %v645 = vadd.f32 %v644, %v614
        %v646 = vadd.f32 %v645, %v615
        %v647 = vadd.f32 %v646, %v616
        %v648 = vadd.f32 %v647, %v617
        %v649 = vadd.f32 %v648, %v618
        %v650 = vadd.f32 %v649, %v619
        %v651 = vadd.f32 %v650, %v620
        %v652 = vadd.f32 %v651, %v621
        %v653 = vadd.f32 %v652, %v622
        %v654 = vadd.f32 %v653, %v623
        %v655 = vadd.f32 %v654, %v624
        %v656 = vrot.slane %v655, 4
        %v657 = vadd.f32 %v655, %v656
        %v658 = vrot.slane %v657, 2
        %v659 = vadd.f32 %v657, %v658
        %v660 = vrot.slane %v659, 1
        %v661 = vadd.f32 %v659, %v660
        %vm662 = vcmask 1040384
        %v663 = vsel %vm662, %v592, %v661
        %vm664 = vcmask 1041408
        %v665 = vsel %vm664, %v663, 0.0
        %666 = vst [vmem:[%s241] sm:$0xff] %v665
        %s667 = sand.u32 %s102, 1
        %s668 = scalar_lea.sflag [#allocation4], %s667
        %s669 = sand.u32 %s102, 1
        %s670 = smul.addr %s669, 256
        %s671 = scalar_lea.vmem [#allocation7], %s670
        %s672 = sand.u32 %s128, 1
        %s673 = scalar_lea.sflag [#allocation9], %s672
        %s674 = sand.u32 %s128, 1
        %s675 = smul.addr %s674, 8
        %s676 = scalar_lea.vmem [#allocation8], %s675
        // Predicated region
        $region41: #{tpu_custom_call.1} parent=31 // pred_check
          %p677 = pneg %p112
        $region42: #{tpu_custom_call.1} parent=31 // pred_check_branch
          %679 = sbr.rel (%p677) target = $region44
        $region43: #{tpu_custom_call.1} parent=31 // pred_region
          %s680 = smul.u32 32, %s26
          %s682 = ssub.s32 4096, 4096
          %683 = vsyncadd %s668, %s682
          %s684 = smul.addr %s680, 128
          %s685 = scalar_lea.hbm %s3, %s684
          %s686 = sshll.u32 %s671, 4
          %s687 = int_to_ptr.vmem [resolvable:$true] %s686
          %692 = dma.vmem_to_hbm [thread:$0]  %s687, 4096, %s685, %s668, 128, 128, 8
        $region44: #{tpu_custom_call.1} parent=31 // pred_fallthru
          _
        // Predicated region
        $region45: #{tpu_custom_call.1} parent=31 // pred_check
          %p693 = pneg %p138
        $region46: #{tpu_custom_call.1} parent=31 // pred_check_branch
          %695 = sbr.rel (%p693) target = $region48
        $region47: #{tpu_custom_call.1} parent=31 // pred_region
          %s697 = ssub.s32 128, 128
          %698 = vsyncadd %s673, %s697
          %s699 = smul.addr %s26, 128
          %s700 = scalar_lea.hbm %s4, %s699
          %s702 = sshll.u32 %s676, 4
          %s703 = int_to_ptr.vmem [resolvable:$true] %s702
          %705 = dma.vmem_to_hbm [thread:$0]  %s703, 128, %s700, %s673
        $region48: #{tpu_custom_call.1} parent=31 // pred_fallthru
          _
      $region32: #{tpu_custom_call.1} parent=5 // pred_fallthru
        _
      %p706 = scmp.le.s32.totalorder 2, %s21
      // Predicated region
      $region49: #{tpu_custom_call.1} parent=5 // pred_check
        %p707 = pneg %p706
      $region50: #{tpu_custom_call.1} parent=5 // pred_check_branch
        %709 = sbr.rel (%p707) target = $region52
      $region51: #{tpu_custom_call.1} parent=5 // pred_region
        %s710 = ssub.s32 %s21, 2
        // Predicated region
        $region53: #{tpu_custom_call.1} parent=51 // pred_check
          %p711 = pneg %p118
        $region54: #{tpu_custom_call.1} parent=51 // pred_check_branch
          %713 = sbr.rel (%p711) target = $region56
        $region55: #{tpu_custom_call.1} parent=51 // pred_region
          %s714 = sand.u32 %s103, 1
          %s715 = scalar_lea.sflag [#allocation4], %s714
          %s716 = sand.u32 %s103, 1
          %s717 = smul.addr %s716, 256
          %s718 = scalar_lea.vmem [#allocation7], %s717
          %719 = dma.done %s715, 4096
        $region56: #{tpu_custom_call.1} parent=51 // pred_fallthru
          _
        // Predicated region
        $region57: #{tpu_custom_call.1} parent=51 // pred_check
          %p720 = pneg %p144
        $region58: #{tpu_custom_call.1} parent=51 // pred_check_branch
          %722 = sbr.rel (%p720) target = $region60
        $region59: #{tpu_custom_call.1} parent=51 // pred_region
          %s723 = sand.u32 %s129, 1
          %s724 = scalar_lea.sflag [#allocation9], %s723
          %s725 = sand.u32 %s129, 1
          %s726 = smul.addr %s725, 8
          %s727 = scalar_lea.vmem [#allocation8], %s726
          %728 = dma.done %s724, 128
        $region60: #{tpu_custom_call.1} parent=51 // pred_fallthru
          _
      $region52: #{tpu_custom_call.1} parent=5 // pred_fallthru
        _
    $region6: #{tpu_custom_call.1} parent=1 // loop_footer
      %s25 = sadd.s32 1, %s21
    $region7: #{tpu_custom_call.1} parent=1 // loop_footer_branch
      %20 = sbr.rel target = $region3
    $region8: #{tpu_custom_call.1} parent=1 // loop_exit
      _
    %729 = vsyncpa [#allocation3], 1
    %s730 = scalar_lea.sflag [#allocation3], 1
    %731 = vsyncpa %s730, 1
    %732 = vsyncpa [#allocation6], 1
    %733 = vsyncpa [#allocation4], 1
    %s734 = scalar_lea.sflag [#allocation4], 1
    %735 = vsyncpa %s734, 1
    %736 = vsyncpa [#allocation9], 1
    %s737 = scalar_lea.sflag [#allocation9], 1
    %738 = vsyncpa %s737, 1

</llo_original>
